<compile_context>
chip_gen: v5e
topology: v5e:2x2
jax: 0.10.0
libtpu: 0.0.40
codegen_flags: <defaults>
</compile_context>

<pallas_src>
import functools

import jax
import jax.numpy as jnp
from jax.experimental import pallas as pl
from jax.experimental.pallas import tpu as pltpu


def _vmem_spec():
    return pl.BlockSpec(memory_space=pltpu.MemorySpace.VMEM)


def _compiler_params():
    return pltpu.CompilerParams(
        dimension_semantics=("parallel",),
        vmem_limit_bytes=32 * 1024 * 1024,
    )


# ----------------------------- in-kernel helpers -----------------------------

def _leaky(x):
    return jnp.where(x > 0, x, 0.2 * x)


def _wcat3(x):
    """(H, W, C) -> (H+2, W, 3*C): lane-concat of the [w-1, w, w+1] neighbours of
    every pixel, zero padded on the H and W borders.  After this, tap (kh, kw) of
    output row h is the free leading-axis slice wcat[h+kh] contracted over one
    C-wide lane block, so the 3 kw taps fuse into one K = 3*C matmul."""
    H, W, C = x.shape
    zc = jnp.zeros((H, 1, C), x.dtype)
    left = jnp.concatenate([zc, x[:, :W - 1, :]], axis=1)     # value at w-1
    right = jnp.concatenate([x[:, 1:, :], zc], axis=1)        # value at w+1
    cat = jnp.concatenate([left, x, right], axis=-1)          # (H, W, 3C)
    zr = jnp.zeros((1, W, 3 * C), x.dtype)
    return jnp.concatenate([zr, cat, zr], axis=0)             # (H+2, W, 3C)


def _conv3x3_rows(xcat, w_ref, b_ref, act):
    """3x3 conv (padding=1) from the lane-concatenated neighbourhood tensor.

    xcat: (H+2, W, 3*Cin), w_ref: (3, 3*Cin, Cout), b_ref: (1, Cout).
    Returns (H*W, Cout).  Output rows are processed in tiles of <=128 rows so the
    live f32 accumulator stays at <=16 vregs (no spill traffic)."""
    Hp2, W, C3 = xcat.shape
    H = Hp2 - 2
    th = max(1, min(H, 128 // W))           # output H-rows per tile
    tiles = []
    for h0 in range(0, H, th):
        rows = th * W
        acc = jnp.dot(xcat[h0:h0 + th].reshape(rows, C3), w_ref[0],
                      preferred_element_type=jnp.float32)
        acc = acc + jnp.dot(xcat[h0 + 1:h0 + 1 + th].reshape(rows, C3), w_ref[1],
                            preferred_element_type=jnp.float32)
        acc = acc + jnp.dot(xcat[h0 + 2:h0 + 2 + th].reshape(rows, C3), w_ref[2],
                            preferred_element_type=jnp.float32)
        acc = acc + b_ref[...]
        if act:
            acc = _leaky(acc)
        tiles.append(acc)
    return tiles[0] if len(tiles) == 1 else jnp.concatenate(tiles, axis=0)


# ------------------------------- Pallas kernels -------------------------------

def _conv1_kernel(p_ref, w_ref, b_ref, o_ref):
    # p_ref: (H*W, K) im2col patches of one image; w_ref: (K, Cout); o_ref: (H, W, Cout)
    H, W, Cout = o_ref.shape
    y = jnp.dot(p_ref[...], w_ref[...], preferred_element_type=jnp.float32)
    y = _leaky(y + b_ref[...])
    o_ref[...] = y.reshape(H, W, Cout)


def _resblock_kernel(x_ref, w1_ref, b1_ref, w2_ref, b2_ref, *rest,
                     has_skip, downsample):
    # One grid step == one batch element; the whole residual block is fused:
    # conv1+leaky_relu -> conv2 -> (+ 1x1-conv skip) -> 2x2 avg-pool -> leaky_relu.
    i = 0
    skip_ref = None
    pool_ref = None
    if has_skip:
        skip_ref = rest[i]; i += 1
    if downsample:
        pool_ref = rest[i]; i += 1
    o_ref = rest[i]

    H, W, Cin = x_ref.shape
    Cout = o_ref.shape[-1]

    x = x_ref[...]
    h = _conv3x3_rows(_wcat3(x), w1_ref, b1_ref, act=True)               # (H*W, Cout)
    s = _conv3x3_rows(_wcat3(h.reshape(H, W, Cout)), w2_ref, b2_ref, act=False)
    if has_skip:
        skip = jnp.dot(x.reshape(H * W, Cin), skip_ref[...],
                       preferred_element_type=jnp.float32)
    else:
        skip = x.reshape(H * W, Cin)                                      # Cin == Cout
    s = s + skip
    if downsample:
        # 2x2 average pool as a tiny (Ho*Wo, H*W) x (H*W, Cout) matmul:
        # no sublane/lane repacking, the (idle) MXU does the work.
        s = jnp.dot(pool_ref[...], s, preferred_element_type=jnp.float32)
    o_ref[...] = _leaky(s).reshape(o_ref.shape)


def _head_kernel(x_ref, w_ref, b_ref, o_ref):
    # relu -> sum over spatial positions -> linear (C -> 1)
    x = jnp.maximum(x_ref[...], 0.0)
    pooled = jnp.sum(x, axis=(1, 2))                                      # (B, C)
    y = jnp.dot(pooled, w_ref[...], preferred_element_type=jnp.float32)
    o_ref[...] = y + b_ref[...]


# ------------------------------- wrappers -------------------------------------

def _im2col_3x3(x, k_pad):
    """NHWC (B,H,W,C) -> (B, H*W, k_pad) 3x3/pad=1 patches (zero padded lanes)."""
    B, H, W, C = x.shape
    xp = jnp.pad(x, ((0, 0), (1, 1), (1, 1), (0, 0)))
    cols = [xp[:, kh:kh + H, kw:kw + W, :] for kh in range(3) for kw in range(3)]
    p = jnp.concatenate(cols, axis=-1).reshape(B, H * W, 9 * C)
    if k_pad > 9 * C:
        p = jnp.pad(p, ((0, 0), (0, 0), (0, k_pad - 9 * C)))
    return p


def _pool_matrix(H, W):
    """(Ho*Wo, H*W) matrix performing 2x2 average pooling on h-major flattened rows."""
    Ho, Wo = H // 2, W // 2
    r = jnp.arange(Ho * Wo)
    h2, w2 = r // Wo, r % Wo
    base = 2 * h2 * W + 2 * w2
    cols = jnp.stack([base, base + 1, base + W, base + W + 1], axis=1)
    P = jnp.zeros((Ho * Wo, H * W), jnp.float32)
    return P.at[r[:, None], cols].set(0.25)


def conv1(x, w, b):
    B, H, W, _ = x.shape
    K, Cout = w.shape
    patches = _im2col_3x3(x, K)
    return pl.pallas_call(
        _conv1_kernel,
        grid=(B,),
        in_specs=[pl.BlockSpec((None, H * W, K), lambda i: (i, 0, 0)),
                  pl.BlockSpec((K, Cout), lambda i: (0, 0)),      # resident weight
                  pl.BlockSpec((1, Cout), lambda i: (0, 0))],
        out_specs=pl.BlockSpec((None, H, W, Cout), lambda i: (i, 0, 0, 0)),
        out_shape=jax.ShapeDtypeStruct((B, H, W, Cout), jnp.float32),
        compiler_params=_compiler_params(),
    )(patches, w, b.reshape(1, Cout))


def resblock(x, blk):
    B, H, W, Cin = x.shape
    w1, b1 = blk['conv1']
    w2, b2 = blk['conv2']
    Cout = w1.shape[-1]
    down = blk['downsample']
    has_skip = blk['skip'] is not None
    Ho, Wo = (H // 2, W // 2) if down else (H, W)

    in_specs = [
        pl.BlockSpec((None, H, W, Cin), lambda i: (i, 0, 0, 0)),          # x: per batch
        pl.BlockSpec((3, 3 * Cin, Cout), lambda i: (0, 0, 0)),            # w1: resident
        pl.BlockSpec((1, Cout), lambda i: (0, 0)),
        pl.BlockSpec((3, 3 * Cout, Cout), lambda i: (0, 0, 0)),           # w2: resident
        pl.BlockSpec((1, Cout), lambda i: (0, 0)),
    ]
    args = [x, w1, b1.reshape(1, Cout), w2, b2.reshape(1, Cout)]
    if has_skip:
        in_specs.append(pl.BlockSpec((Cin, Cout), lambda i: (0, 0)))
        args.append(blk['skip'])
    if down:
        in_specs.append(pl.BlockSpec((Ho * Wo, H * W), lambda i: (0, 0)))
        args.append(_pool_matrix(H, W))

    return pl.pallas_call(
        functools.partial(_resblock_kernel, has_skip=has_skip, downsample=down),
        grid=(B,),
        in_specs=in_specs,
        out_specs=pl.BlockSpec((None, Ho, Wo, Cout), lambda i: (i, 0, 0, 0)),
        out_shape=jax.ShapeDtypeStruct((B, Ho, Wo, Cout), jnp.float32),
        compiler_params=_compiler_params(),
    )(*args)


def head(x, w, b):
    B = x.shape[0]
    return pl.pallas_call(
        _head_kernel,
        out_shape=jax.ShapeDtypeStruct((B, 1), jnp.float32),
        in_specs=[_vmem_spec(), _vmem_spec(), _vmem_spec()],
        out_specs=_vmem_spec(),
    )(x, w, b.reshape(1, 1))


# ------------------------- parameters (deterministic) -------------------------

def spectral_normalize(w, u, bound=False):
    # Mirrors SpectralNorm.compute_weight (one power-iteration step from buffer u).
    wm = w.reshape(w.shape[0], -1)
    v = wm.T @ u
    v = v / jnp.linalg.norm(v)
    u2 = wm @ v
    u2 = u2 / jnp.linalg.norm(u2)
    sigma = u2 @ wm @ v
    if bound:
        return w / (sigma + 1e-6) * jnp.minimum(sigma, 1.0)
    return w / sigma


def _pack_conv3x3(w_torch):
    # (Cout, Cin, 3, 3) -> (3, 3*Cin, Cout); row index within tap-row kh is kw*Cin+ci,
    # matching the [w-1, w, w+1] lane blocks produced by _wcat3.
    cout, cin = w_torch.shape[0], w_torch.shape[1]
    return jnp.transpose(w_torch, (2, 3, 1, 0)).reshape(3, 3 * cin, cout)


def _pack_conv3x3_im2col(w_torch, k_pad):
    # (Cout, Cin, 3, 3) -> (k_pad, Cout), row index = (kh*3+kw)*Cin + ci, zero padded.
    cout, cin = w_torch.shape[0], w_torch.shape[1]
    w = jnp.transpose(w_torch, (2, 3, 1, 0)).reshape(9 * cin, cout)
    return jnp.pad(w, ((0, k_pad - 9 * cin), (0, 0)))


def init_params(key, in_channels=3):
    keys = jax.random.split(key, 40)
    it = iter(keys)

    def sn_conv(cin, cout, ksize, std=1.0, bound=False):
        w = jax.random.normal(next(it), (cout, cin, ksize, ksize), jnp.float32) * std
        u = jax.random.normal(next(it), (cout,), jnp.float32)
        return spectral_normalize(w, u, bound)

    # conv1: im2col layout, K = 9*in_channels padded up to a multiple of 32 lanes.
    k1 = ((9 * in_channels + 31) // 32) * 32
    w1 = sn_conv(in_channels, 128, 3, std=1.0)
    # NOTE: the reference's custom spectral_norm zeroes conv biases at init.
    params = {'conv1': (_pack_conv3x3_im2col(w1, k1), jnp.zeros((128,), jnp.float32))}

    cfg = [(128, 128, True), (128, 128, False), (128, 256, True),
           (256, 256, False), (256, 256, True), (256, 256, False)]
    blocks = []
    for cin, cout, down in cfg:
        c1 = sn_conv(cin, cout, 3, std=1.0)
        c2 = sn_conv(cout, cout, 3, std=1e-10, bound=True)
        blk = {'conv1': (_pack_conv3x3(c1), jnp.zeros((cout,), jnp.float32)),
               'conv2': (_pack_conv3x3(c2), jnp.zeros((cout,), jnp.float32)),
               'downsample': down, 'skip': None}
        if cin != cout or down:
            sw = sn_conv(cin, cout, 1, std=1.0)             # (cout, cin, 1, 1), no bias
            blk['skip'] = jnp.transpose(sw[:, :, 0, 0])     # (cin, cout)
        blocks.append(blk)
    params['blocks'] = blocks

    lim = 1.0 / jnp.sqrt(256.0)
    lw = jax.random.uniform(next(it), (256, 1), jnp.float32, -lim, lim)
    lb = jax.random.uniform(next(it), (1,), jnp.float32, -lim, lim)
    params['linear'] = (lw, lb)
    return params


# --------------------------------- forward ------------------------------------

def igebm_forward(params, x_nchw):
    # n_class=None path: no class embedding; conv biases exist (zeroed by SN init).
    x = jnp.transpose(x_nchw, (0, 2, 3, 1)).astype(jnp.float32)   # NCHW -> NHWC
    w1, b1 = params['conv1']
    out = conv1(x, w1, b1)                     # conv1 + leaky_relu
    for blk in params['blocks']:
        out = resblock(out, blk)               # fused residual block
    lw, lb = params['linear']
    return head(out, lw, lb)                   # relu -> spatial sum -> linear


if __name__ == "__main__":
    key = jax.random.PRNGKey(0)
    pkey, xkey = jax.random.split(key)
    params = init_params(pkey, in_channels=3)
    x = jax.random.normal(xkey, (2, 3, 16, 16), jnp.float32)      # NCHW like PyTorch
    out = igebm_forward(params, x)
    jax.block_until_ready(out)
    assert out.shape == (2, 1), out.shape
    print("KERNEL_OK")
</pallas_src>

<mosaic_0001>
module attributes {stable_mosaic.version = 11 : i64} {
  func.func @_conv1_kernel(%arg0: i32, %arg1: memref<1x256x32xf32, #tpu.memory_space<vmem>>, %arg2: memref<32x128xf32, #tpu.memory_space<vmem>>, %arg3: memref<1x128xf32, #tpu.memory_space<vmem>>, %arg4: memref<1x16x16x128xf32, #tpu.memory_space<vmem>>) attributes {dimension_semantics = [#tpu.dimension_semantics<parallel>], iteration_bounds = array<i64: 2>, scalar_prefetch = 0 : i64, scratch_operands = 0 : i64, tpu.core_type = #tpu.core_type<tc>, window_params = [{transform_indices = @transform_0, window_bounds = array<i64: 1, 256, 32>}, {pipeline_mode = #tpu.pipeline_mode<synchronous>, transform_indices = @transform_1, window_bounds = array<i64: 32, 128>}, {pipeline_mode = #tpu.pipeline_mode<synchronous>, transform_indices = @transform_2, window_bounds = array<i64: 1, 128>}, {transform_indices = @transform_3, window_bounds = array<i64: 1, 16, 16, 128>}]} {
    %c0 = arith.constant 0 : index
    %c0_0 = arith.constant 0 : index
    %c0_1 = arith.constant 0 : index
    %0 = vector.load %arg1[%c0, %c0_0, %c0_1] : memref<1x256x32xf32, #tpu.memory_space<vmem>>, vector<1x256x32xf32>
    %1 = vector.shape_cast %0 : vector<1x256x32xf32> to vector<256x32xf32>
    %c0_2 = arith.constant 0 : index
    %c0_3 = arith.constant 0 : index
    %2 = vector.load %arg2[%c0_2, %c0_3] : memref<32x128xf32, #tpu.memory_space<vmem>>, vector<32x128xf32>
    %cst = arith.constant dense<0.000000e+00> : vector<256x128xf32>
    %3 = tpu.matmul %1, %2, %cst {dimension_numbers = #tpu.dot_dimension_numbers<[1], [0], [0], [1], [0, 0, 1, 1], [], []>} : vector<256x32xf32>, vector<32x128xf32>, vector<256x128xf32> -> vector<256x128xf32>
    %c0_4 = arith.constant 0 : index
    %c0_5 = arith.constant 0 : index
    %4 = vector.load %arg3[%c0_4, %c0_5] : memref<1x128xf32, #tpu.memory_space<vmem>>, vector<1x128xf32>
    %5 = vector.broadcast %4 : vector<1x128xf32> to vector<256x128xf32>
    %6 = arith.addf %3, %5 : vector<256x128xf32>
    %cst_6 = arith.constant 0.000000e+00 : f32
    %7 = vector.broadcast %cst_6 : f32 to vector<256x128xf32>
    %8 = arith.cmpf ogt, %6, %7 : vector<256x128xf32>
    %cst_7 = arith.constant 2.000000e-01 : f32
    %9 = vector.broadcast %cst_7 : f32 to vector<256x128xf32>
    %10 = arith.mulf %9, %6 : vector<256x128xf32>
    %11 = arith.select %8, %6, %10 : vector<256x128xi1>, vector<256x128xf32>
    %12 = vector.shape_cast %11 : vector<256x128xf32> to vector<16x16x128xf32>
    %c0_8 = arith.constant 0 : index
    %c0_9 = arith.constant 0 : index
    %c0_10 = arith.constant 0 : index
    %c0_11 = arith.constant 0 : index
    %13 = vector.load %arg4[%c0_8, %c0_9, %c0_10, %c0_11] : memref<1x16x16x128xf32, #tpu.memory_space<vmem>>, vector<1x16x16x128xf32>
    %14 = vector.shape_cast %13 : vector<1x16x16x128xf32> to vector<16x16x128xf32>
    %15 = vector.shape_cast %12 : vector<16x16x128xf32> to vector<1x16x16x128xf32>
    tpu.vector_store %arg4[%c0_8, %c0_9, %c0_10, %c0_11], %15 {strides = array<i32>} : memref<1x16x16x128xf32, #tpu.memory_space<vmem>>, vector<1x16x16x128xf32>,
    return
  }
  func.func @transform_0(%arg0: i32) -> (i32, i32, i32) {
    %c0_i32 = arith.constant 0 : i32
    %c0_i32_0 = arith.constant 0 : i32
    %c0_i32_1 = arith.constant 0 : i32
    return %arg0, %c0_i32, %c0_i32_0 : i32, i32, i32
  }
  func.func @transform_1(%arg0: i32) -> (i32, i32) {
    %c0_i32 = arith.constant 0 : i32
    %c0_i32_0 = arith.constant 0 : i32
    %c0_i32_1 = arith.constant 0 : i32
    return %c0_i32, %c0_i32_0 : i32, i32
  }
  func.func @transform_2(%arg0: i32) -> (i32, i32) {
    %c0_i32 = arith.constant 0 : i32
    %c0_i32_0 = arith.constant 0 : i32
    %c0_i32_1 = arith.constant 0 : i32
    return %c0_i32, %c0_i32_0 : i32, i32
  }
  func.func @transform_3(%arg0: i32) -> (i32, i32, i32, i32) {
    %c0_i32 = arith.constant 0 : i32
    %c0_i32_0 = arith.constant 0 : i32
    %c0_i32_1 = arith.constant 0 : i32
    %c0_i32_2 = arith.constant 0 : i32
    return %arg0, %c0_i32, %c0_i32_0, %c0_i32_1 : i32, i32, i32, i32
  }
}

</mosaic_0001>

<llo_original>
// kernel: tpu_custom_call.1
$region0: #{tpu_custom_call.1}
  #allocation0 [shape = 'u32[]', space=smem, size = 0x4, offset = 0x4, fixed_abs, tag = 'smem constant byte address 0x4 - core index']
  #allocation1 [shape = 'u32[72,128]{1,0:T(1,128)}', space=vmem, size = 0x9000, scoped, tag = 'internal scratch']
  %s0 = inlined_call_operand.vmem [shape: f32[2,256,32], index: 0, kind: input, shape index: {}]
  %s1 = inlined_call_operand.vmem [shape: f32[32,128], index: 1, kind: input, shape index: {}]
  %s2 = inlined_call_operand.vmem [shape: f32[1,128], index: 2, kind: input, shape index: {}]
  %s3 = inlined_call_operand.hbm [shape: f32[2,16,16,128], index: 3, kind: output, shape index: {}]
  %s4 = sld [smem:[#allocation0]]
  $region45: #{tpu_custom_call.1} parent=0
    _
  %s6 = ssub.s32 1, %s4
  %s7 = scalar_select 0, %s6, %s4
  $region1: #{tpu_custom_call.1} parent=0
    #allocation2 [shape = 'u8[262144]{0}', space=vmem, size = 0x40000, scoped, tag = 'output window, operand 0']
    #allocation3 [shape = 's32[2]{0}', space=sflag, size = 0x8, scoped, tag = 'scoped memory for tpu_custom_call.1']
    %8 = vsyncpa [#allocation3], 0
    %s9 = scalar_lea.sflag [#allocation3], 1
    %10 = vsyncpa %s9, 0
    loop: start=0, step=1, limit=4
    $region2: #{tpu_custom_call.1} parent=1 // loop_pre_header
      _
    $region3: #{tpu_custom_call.1} parent=1 // loop_header
      %s12 = sphi 0, %s16
      %p13 = scmp.ge.s32.totalorder %s12, 4
      %s22 = sphi 0, %s24
      %s25 = sphi 0, %s22
      %s26 = sphi 0, %s25
      %s42 = sphi 0, %s26
      %s46 = sphi 0, %s46
      %s48 = sphi 0, %s46
      %s49 = sphi 0, %s48
      %s63 = sphi 0, %s49
      %s67 = sphi 0, %s67
      %s69 = sphi 0, %s67
      %s70 = sphi 0, %s69
      %s84 = sphi 0, %s70
      %s90 = sphi 0, %s92
      %s93 = sphi 0, %s90
      %s94 = sphi 0, %s93
      %s110 = sphi 0, %s94
    $region4: #{tpu_custom_call.1} parent=1 // loop_header_branch
      %15 = sbr.rel (%p13) target = $region8
    $region5: #{tpu_custom_call.1} parent=1 // loop_body
      %s17 = ssub.s32 %s12, 1
      %s18 = ssub.s32 %s12, 2
      %s19 = sadd.s32 %s12, 1
      %s20 = ssub.s32 %s12, %s19
      %p21 = scmp.eq.s32.totalorder %s20, 0
      %s23 = sadd.s32 %s22, 1
      %s24 = scalar_select %p21, %s22, %s23
      %p27 = pneg %p21
      %p28 = scmp.eq.s32.totalorder %s12, 1
      %p29 = por %p27, %p28
      %p30 = scmp.ne.s32.totalorder %s22, %s25
      %p31 = scmp.eq.s32.totalorder %s12, 0
      %p32 = por %p30, %p31
      %p33 = scmp.ne.s32.totalorder %s22, %s25
      %p34 = scmp.eq.s32.totalorder %s17, 1
      %p35 = por %p33, %p34
      %p36 = scmp.ne.s32.totalorder %s25, %s26
      %p37 = scmp.eq.s32.totalorder %s17, 0
      %p38 = por %p36, %p37
      %p39 = scmp.ne.s32.totalorder %s25, %s26
      %p40 = scmp.eq.s32.totalorder %s18, 1
      %p41 = por %p39, %p40
      %p43 = scmp.ne.s32.totalorder %s26, %s42
      %p44 = scmp.eq.s32.totalorder %s18, 0
      %p45 = por %p43, %p44
      %s47 = sadd.s32 %s46, 1
      %p50 = scmp.eq.s32.totalorder %s12, 1
      %p51 = scmp.ne.s32.totalorder %s46, %s48
      %p52 = scmp.eq.s32.totalorder %s12, 0
      %p53 = por %p51, %p52
      %p54 = scmp.ne.s32.totalorder %s46, %s48
      %p55 = scmp.eq.s32.totalorder %s17, 1
      %p56 = por %p54, %p55
      %p57 = scmp.ne.s32.totalorder %s48, %s49
      %p58 = scmp.eq.s32.totalorder %s17, 0
      %p59 = por %p57, %p58
      %p60 = scmp.ne.s32.totalorder %s48, %s49
      %p61 = scmp.eq.s32.totalorder %s18, 1
      %p62 = por %p60, %p61
      %p64 = scmp.ne.s32.totalorder %s49, %s63
      %p65 = scmp.eq.s32.totalorder %s18, 0
      %p66 = por %p64, %p65
      %s68 = sadd.s32 %s67, 1
      %p71 = scmp.eq.s32.totalorder %s12, 1
      %p72 = scmp.ne.s32.totalorder %s67, %s69
      %p73 = scmp.eq.s32.totalorder %s12, 0
      %p74 = por %p72, %p73
      %p75 = scmp.ne.s32.totalorder %s67, %s69
      %p76 = scmp.eq.s32.totalorder %s17, 1
      %p77 = por %p75, %p76
      %p78 = scmp.ne.s32.totalorder %s69, %s70
      %p79 = scmp.eq.s32.totalorder %s17, 0
      %p80 = por %p78, %p79
      %p81 = scmp.ne.s32.totalorder %s69, %s70
      %p82 = scmp.eq.s32.totalorder %s18, 1
      %p83 = por %p81, %p82
      %p85 = scmp.ne.s32.totalorder %s70, %s84
      %p86 = scmp.eq.s32.totalorder %s18, 0
      %p87 = por %p85, %p86
      %s88 = ssub.s32 %s12, %s19
      %p89 = scmp.eq.s32.totalorder %s88, 0
      %s91 = sadd.s32 %s90, 1
      %s92 = scalar_select %p89, %s90, %s91
      %p95 = pneg %p89
      %p96 = scmp.eq.s32.totalorder %s12, 1
      %p97 = por %p95, %p96
      %p98 = scmp.ne.s32.totalorder %s90, %s93
      %p99 = scmp.eq.s32.totalorder %s12, 0
      %p100 = por %p98, %p99
      %p101 = scmp.ne.s32.totalorder %s90, %s93
      %p102 = scmp.eq.s32.totalorder %s17, 1
      %p103 = por %p101, %p102
      %p104 = scmp.ne.s32.totalorder %s93, %s94
      %p105 = scmp.eq.s32.totalorder %s17, 0
      %p106 = por %p104, %p105
      %p107 = scmp.ne.s32.totalorder %s93, %s94
      %p108 = scmp.eq.s32.totalorder %s18, 1
      %p109 = por %p107, %p108
      %p111 = scmp.ne.s32.totalorder %s94, %s110
      %p112 = scmp.eq.s32.totalorder %s18, 0
      %p113 = por %p111, %p112
      %p114 = scmp.le.s32.totalorder 1, %s12
      %p115 = scmp.lt.s32.totalorder %s12, 3
      %p116 = pnand %p114, %p115
      %p117 = pneg %p116
      // Predicated region
      $region9: #{tpu_custom_call.1} parent=5 // pred_check
        _
      $region10: #{tpu_custom_call.1} parent=5 // pred_check_branch
        %119 = sbr.rel (%p116) target = $region12
      $region11: #{tpu_custom_call.1} parent=5 // pred_region
        %s120 = ssub.s32 %s12, 1
        // Predicated region
        $region13: #{tpu_custom_call.1} parent=11 // pred_check
          %p121 = pneg %p59
        $region14: #{tpu_custom_call.1} parent=11 // pred_check_branch
          %123 = sbr.rel (%p121) target = $region16
        $region15: #{tpu_custom_call.1} parent=11 // pred_region
          _
        $region16: #{tpu_custom_call.1} parent=11 // pred_fallthru
          _
        // Predicated region
        $region17: #{tpu_custom_call.1} parent=11 // pred_check
          %p124 = pneg %p80
        $region18: #{tpu_custom_call.1} parent=11 // pred_check_branch
          %126 = sbr.rel (%p124) target = $region20
        $region19: #{tpu_custom_call.1} parent=11 // pred_region
          _
        $region20: #{tpu_custom_call.1} parent=11 // pred_fallthru
          _
      $region12: #{tpu_custom_call.1} parent=5 // pred_fallthru
        _
      %p127 = scmp.lt.s32.totalorder %s12, 2
      // Predicated region
      $region21: #{tpu_custom_call.1} parent=5 // pred_check
        %p128 = pneg %p127
      $region22: #{tpu_custom_call.1} parent=5 // pred_check_branch
        %130 = sbr.rel (%p128) target = $region24
      $region23: #{tpu_custom_call.1} parent=5 // pred_region
        // Predicated region
        $region25: #{tpu_custom_call.1} parent=23 // pred_check
          %p131 = pneg %p32
        $region26: #{tpu_custom_call.1} parent=23 // pred_check_branch
          %133 = sbr.rel (%p131) target = $region28
        $region27: #{tpu_custom_call.1} parent=23 // pred_region
          %p134 = scmp.lt.s32.totalorder %s12, 1
          %s135 = scalar_select %p134, %s12, 1
          %s136 = smul.addr %s135, 32
          %s137 = smul.addr %s136, 8
          %s138 = scalar_lea.vmem %s0, %s137
        $region28: #{tpu_custom_call.1} parent=23 // pred_fallthru
          _
      $region24: #{tpu_custom_call.1} parent=5 // pred_fallthru
        _
      %p139 = scmp.le.s32.totalorder 1, %s12
      %p140 = scmp.lt.s32.totalorder %s12, 3
      %p141 = pnand %p139, %p140
      %p142 = pneg %p141
      // Predicated region
      $region29: #{tpu_custom_call.1} parent=5 // pred_check
        _
      $region30: #{tpu_custom_call.1} parent=5 // pred_check_branch
        %144 = sbr.rel (%p141) target = $region32
      $region31: #{tpu_custom_call.1} parent=5 // pred_region
        %s145 = ssub.s32 %s12, 1
        %p146 = scmp.lt.s32.totalorder %s17, 1
        %s147 = scalar_select %p146, %s17, 1
        %s148 = smul.addr %s147, 32
        %s149 = smul.addr %s148, 8
        %s150 = scalar_lea.vmem %s0, %s149
        %p151 = pneg %p38
        %p152 = pneg %p35
        %p153 = pneg %p59
        %p154 = pneg %p56
        %p155 = pneg %p80
        %p156 = pneg %p77
        %p157 = pneg %p106
        %p158 = pneg %p103
        %s159 = sand.u32 %s93, 1
        %s160 = scalar_lea.sflag [#allocation3], %s159
        %s161 = sand.u32 %s93, 1
        %s162 = smul.addr %s161, 256
        %s163 = scalar_lea.vmem [#allocation2], %s162
        %p164 = scmp.lt.s32.totalorder %s17, 1
        %s165 = scalar_select %p164, %s17, 1
        %s166 = smul.addr %s165, 32
        %s167 = smul.addr %s166, 8
        %s168 = scalar_lea.vmem %s0, %s167
        %v169 = vld [vmem:[%s168] sm:$0xff]
        %v170 = vld [vmem:[%s168 + $0x8] sm:$0xff]
        %v171 = vld [vmem:[%s168 + $0x10] sm:$0xff]
        %v172 = vld [vmem:[%s168 + $0x18] sm:$0xff]
        %v173 = vld [vmem:[%s168 + $0x20] sm:$0xff]
        %v174 = vld [vmem:[%s168 + $0x28] sm:$0xff]
        %v175 = vld [vmem:[%s168 + $0x30] sm:$0xff]
        %v176 = vld [vmem:[%s168 + $0x38] sm:$0xff]
        %v177 = vld [vmem:[%s168 + $0x40] sm:$0xff]
        %v178 = vld [vmem:[%s168 + $0x48] sm:$0xff]
        %v179 = vld [vmem:[%s168 + $0x50] sm:$0xff]
        %v180 = vld [vmem:[%s168 + $0x58] sm:$0xff]
        %v181 = vld [vmem:[%s168 + $0x60] sm:$0xff]
        %v182 = vld [vmem:[%s168 + $0x68] sm:$0xff]
        %v183 = vld [vmem:[%s168 + $0x70] sm:$0xff]
        %v184 = vld [vmem:[%s168 + $0x78] sm:$0xff]
        %v185 = vld [vmem:[%s168 + $0x80] sm:$0xff]
        %v186 = vld [vmem:[%s168 + $0x88] sm:$0xff]
        %v187 = vld [vmem:[%s168 + $0x90] sm:$0xff]
        %v188 = vld [vmem:[%s168 + $0x98] sm:$0xff]
        %v189 = vld [vmem:[%s168 + $0xa0] sm:$0xff]
        %v190 = vld [vmem:[%s168 + $0xa8] sm:$0xff]
        %v191 = vld [vmem:[%s168 + $0xb0] sm:$0xff]
        %v192 = vld [vmem:[%s168 + $0xb8] sm:$0xff]
        %v193 = vld [vmem:[%s168 + $0xc0] sm:$0xff]
        %v194 = vld [vmem:[%s168 + $0xc8] sm:$0xff]
        %v195 = vld [vmem:[%s168 + $0xd0] sm:$0xff]
        %v196 = vld [vmem:[%s168 + $0xd8] sm:$0xff]
        %v197 = vld [vmem:[%s168 + $0xe0] sm:$0xff]
        %v198 = vld [vmem:[%s168 + $0xe8] sm:$0xff]
        %v199 = vld [vmem:[%s168 + $0xf0] sm:$0xff]
        %v200 = vld [vmem:[%s168 + $0xf8] sm:$0xff]
        %v201 = vld [vmem:[%s1] sm:$0xff]
        %v202 = vld [vmem:[%s1 + $0x8] sm:$0xff]
        %v203 = vld [vmem:[%s1 + $0x10] sm:$0xff]
        %v204 = vld [vmem:[%s1 + $0x18] sm:$0xff]
        %v205 = vld [vmem:[%s2] sm:$0x1]
        %v207 = vperm.slane %v205, 0
        %vm209 = vcmask 261120
        %v211 = vsel %vm209, %v169, 0
        %v214 = vsel %vm209, %v170, 0
        %v217 = vsel %vm209, %v171, 0
        %v220 = vsel %vm209, %v172, 0
        %v223 = vsel %vm209, %v173, 0
        %v226 = vsel %vm209, %v174, 0
        %v229 = vsel %vm209, %v175, 0
        %v232 = vsel %vm209, %v176, 0
        %v235 = vsel %vm209, %v177, 0
        %v238 = vsel %vm209, %v178, 0
        %v241 = vsel %vm209, %v179, 0
        %v244 = vsel %vm209, %v180, 0
        %v247 = vsel %vm209, %v181, 0
        %v250 = vsel %vm209, %v182, 0
        %v253 = vsel %vm209, %v183, 0
        %v256 = vsel %vm209, %v184, 0
        %v259 = vsel %vm209, %v185, 0
        %v262 = vsel %vm209, %v186, 0
        %v265 = vsel %vm209, %v187, 0
        %v268 = vsel %vm209, %v188, 0
        %v271 = vsel %vm209, %v189, 0
        %v274 = vsel %vm209, %v190, 0
        %v277 = vsel %vm209, %v191, 0
        %v280 = vsel %vm209, %v192, 0
        %v283 = vsel %vm209, %v193, 0
        %v286 = vsel %vm209, %v194, 0
        %v289 = vsel %vm209, %v195, 0
        %v292 = vsel %vm209, %v196, 0
        %v295 = vsel %vm209, %v197, 0
        %v298 = vsel %vm209, %v198, 0
        %v301 = vsel %vm209, %v199, 0
        %v304 = vsel %vm209, %v200, 0
        %306 = vmatpush.msra.mxu0 0.0
        %307 = vmatpush.msra.mxu0 0.0
        %308 = vmatpush.msra.mxu0 0.0
        %309 = vmatpush.msra.mxu0 0.0
        %310 = vmatpush.msra.mxu0 0.0
        %311 = vmatpush.msra.mxu0 0.0
        %312 = vmatpush.msra.mxu0 0.0
        %313 = vmatpush.msra.mxu0 0.0
        %314 = vmatpush.msra.mxu0 0.0
        %315 = vmatpush.msra.mxu0 0.0
        %316 = vmatpush.msra.mxu0 0.0
        %317 = vmatpush.msra.mxu0 0.0
        %318 = vmatpush.msra.mxu0 %v204
        %319 = vmatpush.msra.mxu0 %v203
        %320 = vmatpush.msra.mxu0 %v202
        %321 = vmatpush.msra.mxu0 %v201
        %322 = vmatmul.f32.gmra.mxu0 %v211
        %v323 = vpop.f32.mrf.mxu0
        %v324 = vadd.f32 %v207, %v323
        %325 = vmatmul.f32.gmra.mxu0 %v214
        %v326 = vpop.f32.mrf.mxu0
        %v327 = vadd.f32 %v207, %v326
        %328 = vmatmul.f32.gmra.mxu0 %v217
        %v329 = vpop.f32.mrf.mxu0
        %v330 = vadd.f32 %v207, %v329
        %331 = vmatmul.f32.gmra.mxu0 %v220
        %v332 = vpop.f32.mrf.mxu0
        %v333 = vadd.f32 %v207, %v332
        %334 = vmatmul.f32.gmra.mxu0 %v223
        %v335 = vpop.f32.mrf.mxu0
        %v336 = vadd.f32 %v207, %v335
        %337 = vmatmul.f32.gmra.mxu0 %v226
        %v338 = vpop.f32.mrf.mxu0
        %v339 = vadd.f32 %v207, %v338
        %340 = vmatmul.f32.gmra.mxu0 %v229
        %v341 = vpop.f32.mrf.mxu0
        %v342 = vadd.f32 %v207, %v341
        %343 = vmatmul.f32.gmra.mxu0 %v232
        %v344 = vpop.f32.mrf.mxu0
        %v345 = vadd.f32 %v207, %v344
        %346 = vmatmul.f32.gmra.mxu0 %v235
        %v347 = vpop.f32.mrf.mxu0
        %v348 = vadd.f32 %v207, %v347
        %349 = vmatmul.f32.gmra.mxu0 %v238
        %v350 = vpop.f32.mrf.mxu0
        %v351 = vadd.f32 %v207, %v350
        %352 = vmatmul.f32.gmra.mxu0 %v241
        %v353 = vpop.f32.mrf.mxu0
        %v354 = vadd.f32 %v207, %v353
        %355 = vmatmul.f32.gmra.mxu0 %v244
        %v356 = vpop.f32.mrf.mxu0
        %v357 = vadd.f32 %v207, %v356
        %358 = vmatmul.f32.gmra.mxu0 %v247
        %v359 = vpop.f32.mrf.mxu0
        %v360 = vadd.f32 %v207, %v359
        %361 = vmatmul.f32.gmra.mxu0 %v250
        %v362 = vpop.f32.mrf.mxu0
        %v363 = vadd.f32 %v207, %v362
        %364 = vmatmul.f32.gmra.mxu0 %v253
        %v365 = vpop.f32.mrf.mxu0
        %v366 = vadd.f32 %v207, %v365
        %367 = vmatmul.f32.gmra.mxu0 %v256
        %v368 = vpop.f32.mrf.mxu0
        %v369 = vadd.f32 %v207, %v368
        %370 = vmatmul.f32.gmra.mxu0 %v259
        %v371 = vpop.f32.mrf.mxu0
        %v372 = vadd.f32 %v207, %v371
        %373 = vmatmul.f32.gmra.mxu0 %v262
        %v374 = vpop.f32.mrf.mxu0
        %v375 = vadd.f32 %v207, %v374
        %376 = vmatmul.f32.gmra.mxu0 %v265
        %v377 = vpop.f32.mrf.mxu0
        %v378 = vadd.f32 %v207, %v377
        %379 = vmatmul.f32.gmra.mxu0 %v268
        %v380 = vpop.f32.mrf.mxu0
        %v381 = vadd.f32 %v207, %v380
        %382 = vmatmul.f32.gmra.mxu0 %v271
        %v383 = vpop.f32.mrf.mxu0
        %v384 = vadd.f32 %v207, %v383
        %385 = vmatmul.f32.gmra.mxu0 %v274
        %v386 = vpop.f32.mrf.mxu0
        %v387 = vadd.f32 %v207, %v386
        %388 = vmatmul.f32.gmra.mxu0 %v277
        %v389 = vpop.f32.mrf.mxu0
        %v390 = vadd.f32 %v207, %v389
        %391 = vmatmul.f32.gmra.mxu0 %v280
        %v392 = vpop.f32.mrf.mxu0
        %v393 = vadd.f32 %v207, %v392
        %394 = vmatmul.f32.gmra.mxu0 %v283
        %v395 = vpop.f32.mrf.mxu0
        %v396 = vadd.f32 %v207, %v395
        %397 = vmatmul.f32.gmra.mxu0 %v286
        %v398 = vpop.f32.mrf.mxu0
        %v399 = vadd.f32 %v207, %v398
        %400 = vmatmul.f32.gmra.mxu0 %v289
        %v401 = vpop.f32.mrf.mxu0
        %v402 = vadd.f32 %v207, %v401
        %403 = vmatmul.f32.gmra.mxu0 %v292
        %v404 = vpop.f32.mrf.mxu0
        %v405 = vadd.f32 %v207, %v404
        %406 = vmatmul.f32.gmra.mxu0 %v295
        %v407 = vpop.f32.mrf.mxu0
        %v408 = vadd.f32 %v207, %v407
        %409 = vmatmul.f32.gmra.mxu0 %v298
        %v410 = vpop.f32.mrf.mxu0
        %v411 = vadd.f32 %v207, %v410
        %412 = vmatmul.f32.gmra.mxu0 %v301
        %v413 = vpop.f32.mrf.mxu0
        %v414 = vadd.f32 %v207, %v413
        %415 = vmatmul.f32.gmra.mxu0 %v304
        %v416 = vpop.f32.mrf.mxu0
        %v417 = vadd.f32 %v207, %v416
        %418 = vdwg.mxu0
        %vm419 = vcmp.gt.f32.partialorder %v324, 0.0
        %vm420 = vcmp.gt.f32.partialorder %v327, 0.0
        %vm421 = vcmp.gt.f32.partialorder %v330, 0.0
        %vm422 = vcmp.gt.f32.partialorder %v333, 0.0
        %vm423 = vcmp.gt.f32.partialorder %v336, 0.0
        %vm424 = vcmp.gt.f32.partialorder %v339, 0.0
        %vm425 = vcmp.gt.f32.partialorder %v342, 0.0
        %vm426 = vcmp.gt.f32.partialorder %v345, 0.0
        %vm427 = vcmp.gt.f32.partialorder %v348, 0.0
        %vm428 = vcmp.gt.f32.partialorder %v351, 0.0
        %vm429 = vcmp.gt.f32.partialorder %v354, 0.0
        %vm430 = vcmp.gt.f32.partialorder %v357, 0.0
        %vm431 = vcmp.gt.f32.partialorder %v360, 0.0
        %vm432 = vcmp.gt.f32.partialorder %v363, 0.0
        %vm433 = vcmp.gt.f32.partialorder %v366, 0.0
        %vm434 = vcmp.gt.f32.partialorder %v369, 0.0
        %vm435 = vcmp.gt.f32.partialorder %v372, 0.0
        %vm436 = vcmp.gt.f32.partialorder %v375, 0.0
        %vm437 = vcmp.gt.f32.partialorder %v378, 0.0
        %vm438 = vcmp.gt.f32.partialorder %v381, 0.0
        %vm439 = vcmp.gt.f32.partialorder %v384, 0.0
        %vm440 = vcmp.gt.f32.partialorder %v387, 0.0
        %vm441 = vcmp.gt.f32.partialorder %v390, 0.0
        %vm442 = vcmp.gt.f32.partialorder %v393, 0.0
        %vm443 = vcmp.gt.f32.partialorder %v396, 0.0
        %vm444 = vcmp.gt.f32.partialorder %v399, 0.0
        %vm445 = vcmp.gt.f32.partialorder %v402, 0.0
        %vm446 = vcmp.gt.f32.partialorder %v405, 0.0
        %vm447 = vcmp.gt.f32.partialorder %v408, 0.0
        %vm448 = vcmp.gt.f32.partialorder %v411, 0.0
        %vm449 = vcmp.gt.f32.partialorder %v414, 0.0
        %vm450 = vcmp.gt.f32.partialorder %v417, 0.0
        %v451 = vmul.f32 %v324, 0.2
        %v452 = vmul.f32 %v327, 0.2
        %v453 = vmul.f32 %v330, 0.2
        %v454 = vmul.f32 %v333, 0.2
        %v455 = vmul.f32 %v336, 0.2
        %v456 = vmul.f32 %v339, 0.2
        %v457 = vmul.f32 %v342, 0.2
        %v458 = vmul.f32 %v345, 0.2
        %v459 = vmul.f32 %v348, 0.2
        %v460 = vmul.f32 %v351, 0.2
        %v461 = vmul.f32 %v354, 0.2
        %v462 = vmul.f32 %v357, 0.2
        %v463 = vmul.f32 %v360, 0.2
        %v464 = vmul.f32 %v363, 0.2
        %v465 = vmul.f32 %v366, 0.2
        %v466 = vmul.f32 %v369, 0.2
        %v467 = vmul.f32 %v372, 0.2
        %v468 = vmul.f32 %v375, 0.2
        %v469 = vmul.f32 %v378, 0.2
        %v470 = vmul.f32 %v381, 0.2
        %v471 = vmul.f32 %v384, 0.2
        %v472 = vmul.f32 %v387, 0.2
        %v473 = vmul.f32 %v390, 0.2
        %v474 = vmul.f32 %v393, 0.2
        %v475 = vmul.f32 %v396, 0.2
        %v476 = vmul.f32 %v399, 0.2
        %v477 = vmul.f32 %v402, 0.2
        %v478 = vmul.f32 %v405, 0.2
        %v479 = vmul.f32 %v408, 0.2
        %v480 = vmul.f32 %v411, 0.2
        %v481 = vmul.f32 %v414, 0.2
        %v482 = vmul.f32 %v417, 0.2
        %v483 = vsel %vm419, %v324, %v451
        %v484 = vsel %vm420, %v327, %v452
        %v485 = vsel %vm421, %v330, %v453
        %v486 = vsel %vm422, %v333, %v454
        %v487 = vsel %vm423, %v336, %v455
        %v488 = vsel %vm424, %v339, %v456
        %v489 = vsel %vm425, %v342, %v457
        %v490 = vsel %vm426, %v345, %v458
        %v491 = vsel %vm427, %v348, %v459
        %v492 = vsel %vm428, %v351, %v460
        %v493 = vsel %vm429, %v354, %v461
        %v494 = vsel %vm430, %v357, %v462
        %v495 = vsel %vm431, %v360, %v463
        %v496 = vsel %vm432, %v363, %v464
        %v497 = vsel %vm433, %v366, %v465
        %v498 = vsel %vm434, %v369, %v466
        %v499 = vsel %vm435, %v372, %v467
        %v500 = vsel %vm436, %v375, %v468
        %v501 = vsel %vm437, %v378, %v469
        %v502 = vsel %vm438, %v381, %v470
        %v503 = vsel %vm439, %v384, %v471
        %v504 = vsel %vm440, %v387, %v472
        %v505 = vsel %vm441, %v390, %v473
        %v506 = vsel %vm442, %v393, %v474
        %v507 = vsel %vm443, %v396, %v475
        %v508 = vsel %vm444, %v399, %v476
        %v509 = vsel %vm445, %v402, %v477
        %v510 = vsel %vm446, %v405, %v478
        %v511 = vsel %vm447, %v408, %v479
        %v512 = vsel %vm448, %v411, %v480
        %v513 = vsel %vm449, %v414, %v481
        %v514 = vsel %vm450, %v417, %v482
        %515 = vst [vmem:[%s163] sm:$0xff] %v483
        %516 = vst [vmem:[%s163 + $0x8] sm:$0xff] %v484
        %517 = vst [vmem:[%s163 + $0x10] sm:$0xff] %v485
        %518 = vst [vmem:[%s163 + $0x18] sm:$0xff] %v486
        %519 = vst [vmem:[%s163 + $0x20] sm:$0xff] %v487
        %520 = vst [vmem:[%s163 + $0x28] sm:$0xff] %v488
        %521 = vst [vmem:[%s163 + $0x30] sm:$0xff] %v489
        %522 = vst [vmem:[%s163 + $0x38] sm:$0xff] %v490
        %523 = vst [vmem:[%s163 + $0x40] sm:$0xff] %v491
        %524 = vst [vmem:[%s163 + $0x48] sm:$0xff] %v492
        %525 = vst [vmem:[%s163 + $0x50] sm:$0xff] %v493
        %526 = vst [vmem:[%s163 + $0x58] sm:$0xff] %v494
        %527 = vst [vmem:[%s163 + $0x60] sm:$0xff] %v495
        %528 = vst [vmem:[%s163 + $0x68] sm:$0xff] %v496
        %529 = vst [vmem:[%s163 + $0x70] sm:$0xff] %v497
        %530 = vst [vmem:[%s163 + $0x78] sm:$0xff] %v498
        %531 = vst [vmem:[%s163 + $0x80] sm:$0xff] %v499
        %532 = vst [vmem:[%s163 + $0x88] sm:$0xff] %v500
        %533 = vst [vmem:[%s163 + $0x90] sm:$0xff] %v501
        %534 = vst [vmem:[%s163 + $0x98] sm:$0xff] %v502
        %535 = vst [vmem:[%s163 + $0xa0] sm:$0xff] %v503
        %536 = vst [vmem:[%s163 + $0xa8] sm:$0xff] %v504
        %537 = vst [vmem:[%s163 + $0xb0] sm:$0xff] %v505
        %538 = vst [vmem:[%s163 + $0xb8] sm:$0xff] %v506
        %539 = vst [vmem:[%s163 + $0xc0] sm:$0xff] %v507
        %540 = vst [vmem:[%s163 + $0xc8] sm:$0xff] %v508
        %541 = vst [vmem:[%s163 + $0xd0] sm:$0xff] %v509
        %542 = vst [vmem:[%s163 + $0xd8] sm:$0xff] %v510
        %543 = vst [vmem:[%s163 + $0xe0] sm:$0xff] %v511
        %544 = vst [vmem:[%s163 + $0xe8] sm:$0xff] %v512
        %545 = vst [vmem:[%s163 + $0xf0] sm:$0xff] %v513
        %546 = vst [vmem:[%s163 + $0xf8] sm:$0xff] %v514
        %s547 = sand.u32 %s93, 1
        %s548 = scalar_lea.sflag [#allocation3], %s547
        %s549 = sand.u32 %s93, 1
        %s550 = smul.addr %s549, 256
        %s551 = scalar_lea.vmem [#allocation2], %s550
        // Predicated region
        $region33: #{tpu_custom_call.1} parent=31 // pred_check
          %p552 = pneg %p103
        $region34: #{tpu_custom_call.1} parent=31 // pred_check_branch
          %554 = sbr.rel (%p552) target = $region36
        $region35: #{tpu_custom_call.1} parent=31 // pred_region
          %556 = vsyncadd %s548, 0
          %s557 = smul.addr %s17, 32
          %s558 = smul.addr %s557, 8
          %s559 = scalar_lea.hbm %s3, %s558
          %s560 = sshll.u32 %s551, 4
          %s561 = int_to_ptr.vmem [resolvable:$true] %s560
          %s562 = sshll.u32 %s559, 4
          %s563 = int_to_ptr.hbm [resolvable:$true] %s562
          %568 = dma.vmem_to_hbm [thread:$0]  %s561, 4096, %s563, %s548, 128, 128, 8
        $region36: #{tpu_custom_call.1} parent=31 // pred_fallthru
          _
      $region32: #{tpu_custom_call.1} parent=5 // pred_fallthru
        _
      %p569 = scmp.le.s32.totalorder 2, %s12
      // Predicated region
      $region37: #{tpu_custom_call.1} parent=5 // pred_check
        %p570 = pneg %p569
      $region38: #{tpu_custom_call.1} parent=5 // pred_check_branch
        %572 = sbr.rel (%p570) target = $region40
      $region39: #{tpu_custom_call.1} parent=5 // pred_region
        %s573 = ssub.s32 %s12, 2
        // Predicated region
        $region41: #{tpu_custom_call.1} parent=39 // pred_check
          %p574 = pneg %p109
        $region42: #{tpu_custom_call.1} parent=39 // pred_check_branch
          %576 = sbr.rel (%p574) target = $region44
        $region43: #{tpu_custom_call.1} parent=39 // pred_region
          %s577 = sand.u32 %s94, 1
          %s578 = scalar_lea.sflag [#allocation3], %s577
          %s579 = sand.u32 %s94, 1
          %s580 = smul.addr %s579, 256
          %s581 = scalar_lea.vmem [#allocation2], %s580
          %583 = dma.done %s578, 4096
        $region44: #{tpu_custom_call.1} parent=39 // pred_fallthru
          _
      $region40: #{tpu_custom_call.1} parent=5 // pred_fallthru
        _
    $region6: #{tpu_custom_call.1} parent=1 // loop_footer
      %s16 = sadd.s32 1, %s12
    $region7: #{tpu_custom_call.1} parent=1 // loop_footer_branch
      %11 = sbr.rel target = $region3
    $region8: #{tpu_custom_call.1} parent=1 // loop_exit
      _
    %584 = vsyncpa [#allocation3], 1
    %s585 = scalar_lea.sflag [#allocation3], 1
    %586 = vsyncpa %s585, 1

</llo_original>
